<compile_context>
chip_gen: v7x
topology: tpu7x:2x2x1
jax: 0.10.0
libtpu: 0.0.40
codegen_flags: <defaults>
</compile_context>

<pallas_src>
import functools

import jax
import jax.numpy as jnp
from jax import lax
from jax.experimental import pallas as pl
from jax.experimental.pallas import tpu as pltpu

LANE = 128


def _round_up(x: int, m: int) -> int:
    return (x + m - 1) // m * m


def _global_concat_pool_kernel(x_ref, out_ref, sum_sc, max_sc, *,
                               hw, tile_hw, num_k, last_valid):
    """One (TILE_R, TILE_HW) block of the streaming avg+max reduction.

    sum_sc: (TILE_R, 128) f32 per-lane partial sums.
    max_sc: (TILE_R, 128) x.dtype per-lane partial maxes.
    last_valid: number of valid columns in the LAST k block (trace-time int).
    """
    k = pl.program_id(1)
    n_chunks = tile_hw // LANE

    @pl.when(k == 0)
    def _init():
        sum_sc[...] = jnp.zeros(sum_sc.shape, sum_sc.dtype)
        max_sc[...] = jnp.full(max_sc.shape, -jnp.inf, max_sc.dtype)

    def accum_full_chunk(j):
        # Plain VALU add/max into the per-lane accumulators; 128-aligned lane
        # slice of the ref -> clean vreg loads, no XLU, no narrow stores.
        xj = x_ref[:, j * LANE:(j + 1) * LANE]
        sum_sc[...] += xj.astype(jnp.float32)
        max_sc[...] = jnp.maximum(max_sc[...], xj)

    def accum_partial_chunk(j, n_valid):
        # Only the single partially-valid chunk of the last block pays the
        # iota/compare/select cost.
        xj = x_ref[:, j * LANE:(j + 1) * LANE]
        lane = lax.broadcasted_iota(jnp.int32, xj.shape, 1)
        valid = lane < n_valid
        neg_inf = jnp.asarray(-jnp.inf, dtype=xj.dtype)
        sum_sc[...] += jnp.where(valid, xj, 0).astype(jnp.float32)
        max_sc[...] = jnp.maximum(max_sc[...], jnp.where(valid, xj, neg_inf))

    masked_last = last_valid != tile_hw  # trace-time bool

    if masked_last and num_k > 1:
        @pl.when(k < num_k - 1)
        def _steady():
            for j in range(n_chunks):
                accum_full_chunk(j)

    if masked_last:
        @pl.when(k == num_k - 1)
        def _last():
            for j in range(n_chunks):
                lo, hi = j * LANE, (j + 1) * LANE
                if hi <= last_valid:
                    accum_full_chunk(j)          # fully valid: unmasked
                elif lo < last_valid:
                    accum_partial_chunk(j, last_valid - lo)
                # else: chunk entirely out of range -> contributes nothing
    else:
        for j in range(n_chunks):
            accum_full_chunk(j)

    @pl.when(k == num_k - 1)
    def _finalize():
        # Single cross-lane (XLU) reduction per row tile.
        row_sum = jnp.sum(sum_sc[...], axis=-1, keepdims=True)     # (TILE_R, 1)
        row_max = jnp.max(max_sc[...], axis=-1, keepdims=True)     # (TILE_R, 1)
        avg = row_sum * jnp.float32(1.0 / hw)
        mx = row_max.astype(jnp.float32)
        # Build (TILE_R, 2): column 0 = avg, column 1 = max.
        col2 = lax.broadcasted_iota(jnp.int32, (avg.shape[0], 2), 1)
        stats = jnp.where(col2 == 0, avg, mx)                      # (TILE_R, 2)
        # Lane-dense writeback: transpose (TILE_R, 2) -> (2, TILE_R) via a tiny
        # identity contraction on the otherwise-idle MXU so the output store is
        # one unmasked lane-dense vst instead of two width-1 masked stores.
        ri = lax.broadcasted_iota(jnp.int32, (2, 2), 0)
        ci = lax.broadcasted_iota(jnp.int32, (2, 2), 1)
        eye2 = (ri == ci).astype(jnp.float32)
        out_t = lax.dot_general(eye2, stats,
                                dimension_numbers=(((1,), (1,)), ((), ())),
                                preferred_element_type=jnp.float32)  # (2, TILE_R)
        out_ref[...] = out_t.astype(out_ref.dtype)


def global_concat_pool_2d(x: jax.Array) -> jax.Array:
    """Pallas equivalent of catalyst GlobalConcatPool2d.forward.

    Args:
        x: (N, C, H, W) floating-point array.
    Returns:
        (N, 2*C, 1, 1): concat([global_avg_pool(x), global_max_pool(x)], axis=1)
    """
    assert x.ndim == 4, x.shape
    assert jnp.issubdtype(x.dtype, jnp.floating), "floating dtype required"
    n, c, h, w = x.shape
    rows = n * c
    hw = h * w
    x2d = x.reshape(rows, hw)

    def _pack(out2):
        # (2, N*C) -> (N, 2*C, 1, 1); channels [0:C] = avg, [C:2C] = max.
        return out2.reshape(2, n, c).transpose(1, 0, 2).reshape(n, 2 * c, 1, 1)

    # Tiny spatial maps (e.g. 7x7 / 8x8): most lanes would be idle and per-step
    # overhead dominates; XLA's fused reduction is as fast or faster.
    if hw < LANE:
        avg = (jnp.sum(x2d.astype(jnp.float32), axis=-1)
               * jnp.float32(1.0 / hw)).astype(x.dtype)
        mx = jnp.max(x2d, axis=-1)
        return _pack(jnp.stack([avg, mx], axis=0))

    itemsize = jnp.dtype(x.dtype).itemsize

    # ---- Reduction (H*W) tiling: always a multiple of 128 lanes. ----
    max_tile_hw = 4096
    if hw <= max_tile_hw:
        # Single k block; any ragged tail is masked once inside that block.
        tile_hw = _round_up(hw, LANE)
    else:
        # Prefer a large exact divisor (no masking at all); otherwise stream
        # max-size blocks and mask only the last one.
        best = 0
        for d in range(max_tile_hw, LANE - 1, -LANE):
            if hw % d == 0:
                best = d
                break
        if best >= max_tile_hw // 4:
            tile_hw = best
        else:
            tile_hw = max_tile_hw

    num_k = pl.cdiv(hw, tile_hw)
    last_valid = hw - (num_k - 1) * tile_hw   # valid columns in the last k block

    # ---- Row tiling: ~4 MiB streaming blocks (x2 for double buffering). ----
    target_block_bytes = 4 * 1024 * 1024
    cap = max(LANE, (target_block_bytes // (tile_hw * itemsize)) // LANE * LANE)
    if rows >= 2 * LANE:
        # Guarantee >= 2 row tiles so v7x's two TensorCores both stream the
        # HBM-bound reduction; costs one extra grid step on single-TC v5e/v6e.
        cap = min(cap, max(LANE, (rows // 2) // LANE * LANE))
    tile_r = rows if rows <= cap else cap

    grid = (pl.cdiv(rows, tile_r), num_k)

    kernel = functools.partial(_global_concat_pool_kernel, hw=hw,
                               tile_hw=tile_hw, num_k=num_k,
                               last_valid=last_valid)

    cost = pl.CostEstimate(
        flops=2 * rows * hw,
        transcendentals=0,
        bytes_accessed=rows * hw * itemsize + 2 * rows * itemsize)

    out2 = pl.pallas_call(
        kernel,
        out_shape=jax.ShapeDtypeStruct((2, rows), x.dtype),
        grid_spec=pltpu.PrefetchScalarGridSpec(
            num_scalar_prefetch=0,
            grid=grid,
            in_specs=[pl.BlockSpec((tile_r, tile_hw), lambda i, k: (i, k))],
            out_specs=pl.BlockSpec((2, tile_r), lambda i, k: (0, i)),
            scratch_shapes=[
                pltpu.VMEM((tile_r, LANE), jnp.float32),   # per-lane partial sums
                pltpu.VMEM((tile_r, LANE), x.dtype),       # per-lane partial maxes
            ],
        ),
        compiler_params=pltpu.CompilerParams(
            dimension_semantics=("parallel", "arbitrary"),
            vmem_limit_bytes=32 * 1024 * 1024,
        ),
        cost_estimate=cost,
    )(x2d)

    return _pack(out2)


if __name__ == "__main__":
    def _reference(x):
        x32 = x.astype(jnp.float32)
        avg = jnp.mean(x32, axis=(2, 3), keepdims=True)
        mx = jnp.max(x32, axis=(2, 3), keepdims=True)
        return jnp.concatenate([avg, mx], axis=1)

    key = jax.random.PRNGKey(0)
    cases = [
        ((2, 4, 16, 16), jnp.float32, 1e-5),    # spec shape: single 256-lane block
        ((2, 3, 64, 48), jnp.float32, 1e-4),    # hw=3072: single block, 24 chunks
        ((2, 4, 56, 56), jnp.float32, 1e-4),    # hw=3136: ragged tail masked once
        ((3, 100, 32, 32), jnp.float32, 1e-4),  # rows=300: multi/ragged row tiles
        ((2, 2, 80, 80), jnp.float32, 1e-4),    # hw=6400: 2 k blocks, exact divisor
        ((2, 4, 101, 128), jnp.float32, 1e-4),  # hw=12928: streamed, masked last k
        ((2, 4, 7, 7), jnp.float32, 1e-5),      # hw=49: small-spatial fallback
        ((2, 4, 16, 16), jnp.bfloat16, 2e-2),   # bf16: native-dtype max accumulator
    ]
    for shape, dtype, tol in cases:
        key, sub = jax.random.split(key)
        x = jax.random.normal(sub, shape, dtype=jnp.float32).astype(dtype)
        out = jax.block_until_ready(global_concat_pool_2d(x))
        nb, cb = shape[0], shape[1]
        assert out.shape == (nb, 2 * cb, 1, 1), (shape, out.shape)
        assert out.dtype == dtype, (shape, out.dtype)
        ref = _reference(x)
        err = float(jnp.max(jnp.abs(out.astype(jnp.float32) - ref)))
        assert err <= tol, (shape, str(dtype), err)

    print("KERNEL_OK")
</pallas_src>

<mosaic_0001>
module attributes {stable_mosaic.version = 11 : i64} {
  func.func @_global_concat_pool_kernel(%arg0: i32, %arg1: i32, %arg2: memref<8x256xf32, #tpu.memory_space<vmem>>, %arg3: memref<2x8xf32, #tpu.memory_space<vmem>>, %arg4: memref<8x128xf32, #tpu.memory_space<vmem>>, %arg5: memref<8x128xf32, #tpu.memory_space<vmem>>) attributes {dimension_semantics = [#tpu.dimension_semantics<parallel>, #tpu.dimension_semantics<arbitrary>], iteration_bounds = array<i64: 1, 1>, scalar_prefetch = 0 : i64, scratch_operands = 2 : i64, tpu.core_type = #tpu.core_type<tc>, window_params = [{transform_indices = @transform_0, window_bounds = array<i64: 8, 256>}, {transform_indices = @transform_1, window_bounds = array<i64: 2, 8>}]} {
    %c0_i32 = arith.constant 0 : i32
    %0 = arith.cmpi eq, %arg1, %c0_i32 : i32
    %1 = arith.extui %0 : i1 to i32
    %c0_i32_0 = arith.constant 0 : i32
    %2 = arith.cmpi ne, %1, %c0_i32_0 : i32
    scf.if %2 {
      %cst = arith.constant 0.000000e+00 : f32
      %20 = vector.broadcast %cst : f32 to vector<8x128xf32>
      %c0_21 = arith.constant 0 : index
      %c0_22 = arith.constant 0 : index
      %21 = vector.load %arg4[%c0_21, %c0_22] : memref<8x128xf32, #tpu.memory_space<vmem>>, vector<8x128xf32>
      tpu.vector_store %arg4[%c0_21, %c0_22], %20 {strides = array<i32>} : memref<8x128xf32, #tpu.memory_space<vmem>>, vector<8x128xf32>,
      %cst_23 = arith.constant 0xFF800000 : f32
      %22 = vector.broadcast %cst_23 : f32 to vector<8x128xf32>
      %c0_24 = arith.constant 0 : index
      %c0_25 = arith.constant 0 : index
      %23 = vector.load %arg5[%c0_24, %c0_25] : memref<8x128xf32, #tpu.memory_space<vmem>>, vector<8x128xf32>
      tpu.vector_store %arg5[%c0_24, %c0_25], %22 {strides = array<i32>} : memref<8x128xf32, #tpu.memory_space<vmem>>, vector<8x128xf32>,
    } else {
    }
    %c0 = arith.constant 0 : index
    %c0_1 = arith.constant 0 : index
    %3 = vector.load %arg2[%c0, %c0_1] : memref<8x256xf32, #tpu.memory_space<vmem>>, vector<8x128xf32>
    %c0_2 = arith.constant 0 : index
    %c0_3 = arith.constant 0 : index
    %4 = vector.load %arg4[%c0_2, %c0_3] : memref<8x128xf32, #tpu.memory_space<vmem>>, vector<8x128xf32>
    %5 = arith.addf %4, %3 : vector<8x128xf32>
    %c0_4 = arith.constant 0 : index
    %c0_5 = arith.constant 0 : index
    %6 = vector.load %arg4[%c0_4, %c0_5] : memref<8x128xf32, #tpu.memory_space<vmem>>, vector<8x128xf32>
    tpu.vector_store %arg4[%c0_4, %c0_5], %5 {strides = array<i32>} : memref<8x128xf32, #tpu.memory_space<vmem>>, vector<8x128xf32>,
    %c0_6 = arith.constant 0 : index
    %c0_7 = arith.constant 0 : index
    %7 = vector.load %arg5[%c0_6, %c0_7] : memref<8x128xf32, #tpu.memory_space<vmem>>, vector<8x128xf32>
    %8 = arith.maximumf %7, %3 : vector<8x128xf32>
    %c0_8 = arith.constant 0 : index
    %c0_9 = arith.constant 0 : index
    %9 = vector.load %arg5[%c0_8, %c0_9] : memref<8x128xf32, #tpu.memory_space<vmem>>, vector<8x128xf32>
    tpu.vector_store %arg5[%c0_8, %c0_9], %8 {strides = array<i32>} : memref<8x128xf32, #tpu.memory_space<vmem>>, vector<8x128xf32>,
    %c0_10 = arith.constant 0 : index
    %c128 = arith.constant 128 : index
    %10 = vector.load %arg2[%c0_10, %c128] : memref<8x256xf32, #tpu.memory_space<vmem>>, vector<8x128xf32>
    %c0_11 = arith.constant 0 : index
    %c0_12 = arith.constant 0 : index
    %11 = vector.load %arg4[%c0_11, %c0_12] : memref<8x128xf32, #tpu.memory_space<vmem>>, vector<8x128xf32>
    %12 = arith.addf %11, %10 : vector<8x128xf32>
    %c0_13 = arith.constant 0 : index
    %c0_14 = arith.constant 0 : index
    %13 = vector.load %arg4[%c0_13, %c0_14] : memref<8x128xf32, #tpu.memory_space<vmem>>, vector<8x128xf32>
    tpu.vector_store %arg4[%c0_13, %c0_14], %12 {strides = array<i32>} : memref<8x128xf32, #tpu.memory_space<vmem>>, vector<8x128xf32>,
    %c0_15 = arith.constant 0 : index
    %c0_16 = arith.constant 0 : index
    %14 = vector.load %arg5[%c0_15, %c0_16] : memref<8x128xf32, #tpu.memory_space<vmem>>, vector<8x128xf32>
    %15 = arith.maximumf %14, %10 : vector<8x128xf32>
    %c0_17 = arith.constant 0 : index
    %c0_18 = arith.constant 0 : index
    %16 = vector.load %arg5[%c0_17, %c0_18] : memref<8x128xf32, #tpu.memory_space<vmem>>, vector<8x128xf32>
    tpu.vector_store %arg5[%c0_17, %c0_18], %15 {strides = array<i32>} : memref<8x128xf32, #tpu.memory_space<vmem>>, vector<8x128xf32>,
    %c0_i32_19 = arith.constant 0 : i32
    %17 = arith.cmpi eq, %arg1, %c0_i32_19 : i32
    %18 = arith.extui %17 : i1 to i32
    %c0_i32_20 = arith.constant 0 : i32
    %19 = arith.cmpi ne, %18, %c0_i32_20 : i32
    scf.if %19 {
      %c0_21 = arith.constant 0 : index
      %c0_22 = arith.constant 0 : index
      %20 = vector.load %arg4[%c0_21, %c0_22] : memref<8x128xf32, #tpu.memory_space<vmem>>, vector<8x128xf32>
      %cst = arith.constant dense<0.000000e+00> : vector<8xf32>
      %21 = vector.multi_reduction <add>, %20, %cst [1] : vector<8x128xf32> to vector<8xf32>
      %22 = vector.shape_cast %21 : vector<8xf32> to vector<8x1xf32>
      %c0_23 = arith.constant 0 : index
      %c0_24 = arith.constant 0 : index
      %23 = vector.load %arg5[%c0_23, %c0_24] : memref<8x128xf32, #tpu.memory_space<vmem>>, vector<8x128xf32>
      %cst_25 = arith.constant dense<0xFF800000> : vector<8xf32>
      %24 = vector.multi_reduction <maximumf>, %23, %cst_25 [1] : vector<8x128xf32> to vector<8xf32>
      %25 = vector.shape_cast %24 : vector<8xf32> to vector<8x1xf32>
      %cst_26 = arith.constant 3.906250e-03 : f32
      %26 = vector.broadcast %cst_26 : f32 to vector<8x1xf32>
      %27 = arith.mulf %22, %26 : vector<8x1xf32>
      %28 = tpu.iota {dimensions = array<i32: 1>} : vector<8x2xi32>
      %c0_i32_27 = arith.constant 0 : i32
      %29 = vector.broadcast %c0_i32_27 : i32 to vector<8x2xi32>
      %30 = arith.cmpi eq, %28, %29 : vector<8x2xi32>
      %31 = vector.shape_cast %27 : vector<8x1xf32> to vector<8x1xf32>
      %32 = vector.broadcast %31 : vector<8x1xf32> to vector<8x2xf32>
      %33 = vector.shape_cast %25 : vector<8x1xf32> to vector<8x1xf32>
      %34 = vector.broadcast %33 : vector<8x1xf32> to vector<8x2xf32>
      %35 = arith.select %30, %32, %34 : vector<8x2xi1>, vector<8x2xf32>
      %36 = tpu.iota {dimensions = array<i32: 0>} : vector<2x2xi32>
      %37 = tpu.iota {dimensions = array<i32: 1>} : vector<2x2xi32>
      %38 = arith.cmpi eq, %36, %37 : vector<2x2xi32>
      %39 = arith.extui %38 : vector<2x2xi1> to vector<2x2xi32>
      %40 = arith.sitofp %39 : vector<2x2xi32> to vector<2x2xf32>
      %cst_28 = arith.constant dense<0.000000e+00> : vector<2x8xf32>
      %41 = tpu.matmul %40, %35, %cst_28 {dimension_numbers = #tpu.dot_dimension_numbers<[1], [1], [0], [0], [0, 0, 1, 0], [], []>} : vector<2x2xf32>, vector<8x2xf32>, vector<2x8xf32> -> vector<2x8xf32>
      %c0_29 = arith.constant 0 : index
      %c0_30 = arith.constant 0 : index
      %42 = vector.load %arg3[%c0_29, %c0_30] : memref<2x8xf32, #tpu.memory_space<vmem>>, vector<2x8xf32>
      tpu.vector_store %arg3[%c0_29, %c0_30], %41 {strides = array<i32>} : memref<2x8xf32, #tpu.memory_space<vmem>>, vector<2x8xf32>,
    } else {
    }
    return
  }
  func.func @transform_0(%arg0: i32, %arg1: i32) -> (i32, i32) {
    %c0_i32 = arith.constant 0 : i32
    return %arg0, %arg1 : i32, i32
  }
  func.func @transform_1(%arg0: i32, %arg1: i32) -> (i32, i32) {
    %c0_i32 = arith.constant 0 : i32
    %c0_i32_0 = arith.constant 0 : i32
    return %c0_i32, %arg0 : i32, i32
  }
}

</mosaic_0001>

<llo_original>
// kernel: tpu_custom_call.1
$region0: #{tpu_custom_call.1}
  #allocation0 [shape = 'u32[]', space=smem, size = 0x4, offset = 0x4, fixed_abs, tag = 'smem constant byte address 0x4 - core index']
  #allocation1 [shape = 'u32[144,128]{1,0:T(1,128)}', space=vmem, size = 0x12000, scoped, tag = 'internal scratch']
  #allocation2 [shape = 'f32[8,128]{1,0:T(8,128)}', space=vmem, size = 0x1000, scoped, tag = 'scratch operand']
  #allocation3 [shape = 'f32[8,128]{1,0:T(8,128)}', space=vmem, size = 0x1000, scoped, tag = 'scratch operand']
  %s0 = inlined_call_operand.hbm [shape: f32[8,256], index: 0, kind: input, shape index: {}]
  %s1 = inlined_call_operand.hbm [shape: f32[2,8], index: 1, kind: output, shape index: {}]
  %s2 = sld [smem:[#allocation0]]
  $region26: #{tpu_custom_call.1} parent=0
    _
  %s4 = ssub.s32 1, %s2
  %s5 = scalar_select 0, %s4, %s2
  $region1: #{tpu_custom_call.1} parent=0
    #allocation4 [shape = 'u8[8192]{0}', space=vmem, size = 0x2000, scoped, tag = 'input window, operand 0, single buffered']
    #allocation5 [shape = 's32[1]{0}', space=sflag, size = 0x4, scoped, tag = 'scoped memory for tpu_custom_call.1']
    #allocation6 [shape = 's32[1]{0}', space=sflag, size = 0x4, scoped, tag = 'scoped memory for tpu_custom_call.1']
    #allocation7 [shape = 'u8[1024]{0}', space=vmem, size = 0x400, scoped, tag = 'output window, operand 0, single buffered']
    %6 = vsyncpa [#allocation5], 0
    %7 = vsyncpa [#allocation6], 0
    // Predicated region
    $region2: #{tpu_custom_call.1} parent=1 // pred_check
      _
    $region3: #{tpu_custom_call.1} parent=1 // pred_check_branch
      %9 = sbr.rel (0) target = $region5
    $region4: #{tpu_custom_call.1} parent=1 // pred_region
      %s11 = ssub.s32 256, 256
      %12 = vsyncadd [#allocation5], %s11
      %s14 = sshll.u32 [#allocation4], 4
      %s15 = int_to_ptr.vmem [resolvable:$true] %s14
      %17 = dma.hbm_to_vmem [thread:$0]  %s0, 256, %s15, [#allocation5]
    $region5: #{tpu_custom_call.1} parent=1 // pred_fallthru
      _
    // Predicated region
    $region6: #{tpu_custom_call.1} parent=1 // pred_check
      _
    $region7: #{tpu_custom_call.1} parent=1 // pred_check_branch
      %19 = sbr.rel (0) target = $region9
    $region8: #{tpu_custom_call.1} parent=1 // pred_region
      %20 = dma.done [#allocation5], 256
    $region9: #{tpu_custom_call.1} parent=1 // pred_fallthru
      _
    %p21 = scmp.eq.s32.totalorder 0, 0
    // Predicated region
    $region10: #{tpu_custom_call.1} parent=1 // pred_check
      %p22 = pneg %p21
    $region11: #{tpu_custom_call.1} parent=1 // pred_check_branch
      %24 = sbr.rel (%p22) target = $region13
    $region12: #{tpu_custom_call.1} parent=1 // pred_region
      %25 = vst [vmem:[#allocation2] sm:$0xff] 0.0
      %26 = vst [vmem:[#allocation3] sm:$0xff] -inf
    $region13: #{tpu_custom_call.1} parent=1 // pred_fallthru
      _
    %v27 = vld [vmem:[#allocation4] sm:$0xff]
    %v28 = vld [vmem:[#allocation2] sm:$0xff]
    %v29 = vadd.f32 %v28, %v27
    %30 = vst [vmem:[#allocation2] sm:$0xff] %v29
    %v31 = vld [vmem:[#allocation3] sm:$0xff]
    %v32 = vmax.f32 %v31, %v27
    %33 = vst [vmem:[#allocation3] sm:$0xff] %v32
    %v34 = vld [vmem:[#allocation4 + $0x8] sm:$0xff]
    %v35 = vld [vmem:[#allocation2] sm:$0xff]
    %v36 = vadd.f32 %v35, %v34
    %37 = vst [vmem:[#allocation2] sm:$0xff] %v36
    %v38 = vld [vmem:[#allocation3] sm:$0xff]
    %v39 = vmax.f32 %v38, %v34
    %40 = vst [vmem:[#allocation3] sm:$0xff] %v39
    // Predicated region
    $region14: #{tpu_custom_call.1} parent=1 // pred_check
      %p41 = pneg %p21
    $region15: #{tpu_custom_call.1} parent=1 // pred_check_branch
      %43 = sbr.rel (%p41) target = $region17
    $region16: #{tpu_custom_call.1} parent=1 // pred_region
      %v44 = vld [vmem:[#allocation2] sm:$0xff]
      %45 = vadd.xlane.f32.xlu0 %v44
      %v46 = vpop.xlane.xlu0 %45
      %v47 = vld [vmem:[#allocation3] sm:$0xff]
      %48 = vmax.xlane.f32.xlu0 %v47
      %v49 = vpop.xlane.xlu0 %48
      %v50 = vmul.f32 %v46, 0.00390625
      %v51 = vlaneseq
      %v52 = vand.u32 %v51, 127
      %vm53 = vcmp.eq.s32.totalorder %v52, 0
      %v54 = vsel %vm53, %v50, %v49
      %v55 = vlaneseq
      %v56 = vshrl.u32 %v55, 7
      %vm57 = vcmp.eq.s32.totalorder %v56, %v52
      %v58 = vsel %vm57, 1, 0
      %v59 = vcvt.s32.f32 %v58
      %vm60 = vcmask 15360
      %v62 = vsel %vm60, %v59, 0
      %v65 = vsel %vm60, %v54, 0
      %67 = vmatprep.subr.mxu0 0.0
      %68 = vmatpush1.xpose.msra.mxu0 %v65
      %69 = vmatprep.subr.mxu0 0.0
      %70 = vmatpush1.xpose.msra.mxu0 0.0
      %71 = vmatprep.subr.mxu0 0.0
      %72 = vmatpush1.xpose.msra.mxu0 0.0
      %73 = vmatprep.subr.mxu0 0.0
      %74 = vmatpush1.xpose.msra.mxu0 0.0
      %75 = vmatprep.subr.mxu0 0.0
      %76 = vmatpush1.xpose.msra.mxu0 0.0
      %77 = vmatprep.subr.mxu0 0.0
      %78 = vmatpush1.xpose.msra.mxu0 0.0
      %79 = vmatprep.subr.mxu0 0.0
      %80 = vmatpush1.xpose.msra.mxu0 0.0
      %81 = vmatprep.subr.mxu0 0.0
      %82 = vmatpush1.xpose.msra.mxu0 0.0
      %83 = vmatprep.subr.mxu0 0.0
      %84 = vmatpush1.xpose.msra.mxu0 0.0
      %85 = vmatprep.subr.mxu0 0.0
      %86 = vmatpush1.xpose.msra.mxu0 0.0
      %87 = vmatprep.subr.mxu0 0.0
      %88 = vmatpush1.xpose.msra.mxu0 0.0
      %89 = vmatprep.subr.mxu0 0.0
      %90 = vmatpush1.xpose.msra.mxu0 0.0
      %91 = vmatprep.subr.mxu0 0.0
      %92 = vmatpush1.xpose.msra.mxu0 0.0
      %93 = vmatprep.subr.mxu0 0.0
      %94 = vmatpush1.xpose.msra.mxu0 0.0
      %95 = vmatprep.subr.mxu0 0.0
      %96 = vmatpush1.xpose.msra.mxu0 0.0
      %97 = vmatprep.subr.mxu0 0.0
      %98 = vmatpush1.xpose.msra.mxu0 0.0
      %99 = vmatprep.subr.mxu0 0.0
      %100 = vmatpush1.xpose.msra.mxu0 0.0
      %101 = vmatprep.subr.mxu0 0.0
      %102 = vmatpush1.xpose.msra.mxu0 0.0
      %103 = vmatprep.subr.mxu0 0.0
      %104 = vmatpush1.xpose.msra.mxu0 0.0
      %105 = vmatprep.subr.mxu0 0.0
      %106 = vmatpush1.xpose.msra.mxu0 0.0
      %107 = vmatprep.subr.mxu0 0.0
      %108 = vmatpush1.xpose.msra.mxu0 0.0
      %109 = vmatprep.subr.mxu0 0.0
      %110 = vmatpush1.xpose.msra.mxu0 0.0
      %111 = vmatprep.subr.mxu0 0.0
      %112 = vmatpush1.xpose.msra.mxu0 0.0
      %113 = vmatprep.subr.mxu0 0.0
      %114 = vmatpush1.xpose.msra.mxu0 0.0
      %115 = vmatprep.subr.mxu0 0.0
      %116 = vmatpush1.xpose.msra.mxu0 0.0
      %117 = vmatprep.subr.mxu0 0.0
      %118 = vmatpush1.xpose.msra.mxu0 0.0
      %119 = vmatprep.subr.mxu0 0.0
      %120 = vmatpush1.xpose.msra.mxu0 0.0
      %121 = vmatprep.subr.mxu0 0.0
      %122 = vmatpush1.xpose.msra.mxu0 0.0
      %123 = vmatprep.subr.mxu0 0.0
      %124 = vmatpush1.xpose.msra.mxu0 0.0
      %125 = vmatprep.subr.mxu0 0.0
      %126 = vmatpush1.xpose.msra.mxu0 0.0
      %127 = vmatprep.subr.mxu0 0.0
      %128 = vmatpush1.xpose.msra.mxu0 0.0
      %129 = vmatprep.subr.mxu0 0.0
      %130 = vmatpush1.xpose.msra.mxu0 0.0
      %131 = vmatprep.mubr.f32.mxu0 0.0
      %132 = vmatmul.mubr.f32.gmra.mrb[0].mxu0 %v62
      %v133 = vpop.f32.mrb[0].mxu0
      %v134 = vadd.f32 0.0, %v133
      %v135 = vpop.f32.mrb[0].mxu0
      %136 = vdwg.mxu0
      %vm137 = vcmask 58368
      %138 = vst.msk [vmem:[#allocation7] sm:$0x3] %vm137, %v134
    $region17: #{tpu_custom_call.1} parent=1 // pred_fallthru
      _
    // Predicated region
    $region18: #{tpu_custom_call.1} parent=1 // pred_check
      _
    $region19: #{tpu_custom_call.1} parent=1 // pred_check_branch
      %140 = sbr.rel (0) target = $region21
    $region20: #{tpu_custom_call.1} parent=1 // pred_region
      %s142 = ssub.s32 32, 32
      %143 = vsyncadd [#allocation6], %s142
      %s145 = sshll.u32 [#allocation7], 4
      %s146 = int_to_ptr.vmem [resolvable:$true] %s145
      %148 = dma.vmem_to_hbm [thread:$0]  %s146, 32, %s1, [#allocation6]
    $region21: #{tpu_custom_call.1} parent=1 // pred_fallthru
      _
    // Predicated region
    $region22: #{tpu_custom_call.1} parent=1 // pred_check
      _
    $region23: #{tpu_custom_call.1} parent=1 // pred_check_branch
      %150 = sbr.rel (0) target = $region25
    $region24: #{tpu_custom_call.1} parent=1 // pred_region
      %151 = dma.done [#allocation6], 32
    $region25: #{tpu_custom_call.1} parent=1 // pred_fallthru
      _
    %152 = vsyncpa [#allocation5], 1
    %153 = vsyncpa [#allocation6], 1

</llo_original>
